<compile_context>
chip_gen: v7x
topology: tpu7x:2x2x1
jax: 0.10.0
libtpu: 0.0.40
codegen_flags: <defaults>
</compile_context>

<pallas_src>
import functools

import jax
import jax.numpy as jnp
from jax.experimental import pallas as pl
from jax.experimental.pallas import tpu as pltpu

SUBLANE = 8  # f32 sublane width (second-to-last-dim alignment for blocks)


def _round_up(n, m):
    return ((n + m - 1) // m) * m


def _leaky_relu(v, negative_slope=0.01):
    # Matches torch.nn.functional.leaky_relu default negative_slope=0.01.
    return jnp.where(v > 0, v, negative_slope * v)


def simple_nn_kernel(x_ref,
                     w1_ref, b1_ref,
                     w2_ref, b2_ref,
                     w3_ref, b3_ref,
                     w4_ref, b4_ref,
                     o_ref):
    """Fused 4-layer MLP on one batch tile. Accumulation / elementwise in f32."""
    cdtype = w1_ref.dtype  # matmul-stream dtype (f32 or bf16)

    x = x_ref[...].astype(cdtype)
    h = jnp.dot(x, w1_ref[...], preferred_element_type=jnp.float32) + b1_ref[...]
    h = _leaky_relu(h)

    h = jnp.dot(h.astype(cdtype), w2_ref[...],
                preferred_element_type=jnp.float32) + b2_ref[...]
    h = _leaky_relu(h)

    h = jnp.dot(h.astype(cdtype), w3_ref[...],
                preferred_element_type=jnp.float32) + b3_ref[...]
    h = _leaky_relu(h)

    out = jnp.dot(h.astype(cdtype), w4_ref[...],
                  preferred_element_type=jnp.float32) + b4_ref[...]
    o_ref[...] = out.astype(o_ref.dtype)


def prepare_params(params, compute_dtype=jnp.float32):
    """One-time weight prep (hoisted out of the forward).

    `params` is 4 pairs of (W, b) with W already in (in_features, out_features)
    layout (i.e. W_pallas = W_pytorch.T) and b of shape (1, out_features).
    Weights are cast to the matmul-stream dtype; biases stay f32 (they are
    added to the f32 accumulator).
    """
    return tuple((w.astype(compute_dtype), b.astype(jnp.float32))
                 for (w, b) in params)


def simple_nn_forward(x, prepared_params, *, tile_batch=2048,
                      small_batch_threshold=256, core_parallel=False):
    """x: (B, state_dim) float32. Returns (B, action_dim) float32."""
    (w1, b1), (w2, b2), (w3, b3), (w4, b4) = prepared_params
    B, S = x.shape
    H1, H2, H3, A = w1.shape[1], w2.shape[1], w3.shape[1], w4.shape[1]
    cdtype = w1.dtype
    x_in = x.astype(cdtype)  # halves the dominant HBM stream when bf16

    wbytes = cdtype.dtype.itemsize if hasattr(cdtype, "dtype") else jnp.dtype(cdtype).itemsize
    weight_bytes = wbytes * (S * H1 + H1 * H2 + H2 * H3 + H3 * A) \
        + 4 * (H1 + H2 + H3 + A)
    flops = 2 * B * (S * H1 + H1 * H2 + H2 * H3 + H3 * A)
    io_bytes = B * S * wbytes + B * A * 4 + weight_bytes

    args = (x_in, w1, b1, w2, b2, w3, b3, w4, b4)

    # ---------------- tiny-batch fast path: no grid, everything in VMEM ------
    if B <= small_batch_threshold:
        vmem = pl.BlockSpec(memory_space=pltpu.MemorySpace.VMEM)
        return pl.pallas_call(
            simple_nn_kernel,
            out_shape=jax.ShapeDtypeStruct((B, A), jnp.float32),
            in_specs=[vmem] * 9,
            out_specs=vmem,
            compiler_params=pltpu.CompilerParams(
                vmem_limit_bytes=32 * 1024 * 1024),
            cost_estimate=pl.CostEstimate(
                flops=flops, transcendentals=0, bytes_accessed=io_bytes),
        )(*args)

    # ---------------- large-batch path: batch-tiled grid, resident weights ---
    TB = min(tile_batch, _round_up(B, SUBLANE))
    TB = max(SUBLANE, (TB // SUBLANE) * SUBLANE)
    if core_parallel:
        # v7x has 2 TensorCores per chip: make sure there are >= 2 grid steps.
        TB = min(TB, max(SUBLANE, _round_up(pl.cdiv(B, 2), SUBLANE)))
    grid = (pl.cdiv(B, TB),)  # no batch padding; Pallas clips the edge block

    in_specs = [
        pl.BlockSpec((TB, S), lambda i: (i, 0)),    # x: tiled over batch
        # Weights / biases: constant block index -> stay resident in VMEM
        # across grid steps (no re-DMA).  pipeline_mode=pl.Buffered(1) would
        # additionally halve their VMEM footprint; left at default for
        # portability (footprint is ~0.26 MiB at hidden=256).
        pl.BlockSpec((S, H1), lambda i: (0, 0)),
        pl.BlockSpec((1, H1), lambda i: (0, 0)),
        pl.BlockSpec((H1, H2), lambda i: (0, 0)),
        pl.BlockSpec((1, H2), lambda i: (0, 0)),
        pl.BlockSpec((H2, H3), lambda i: (0, 0)),
        pl.BlockSpec((1, H3), lambda i: (0, 0)),
        pl.BlockSpec((H3, A), lambda i: (0, 0)),
        pl.BlockSpec((1, A), lambda i: (0, 0)),
    ]
    out_specs = pl.BlockSpec((TB, A), lambda i: (i, 0))

    if core_parallel:
        dim_sem = (pltpu.CORE_PARALLEL,)   # explicit 2-TC split on v7x
    else:
        dim_sem = ("parallel",)            # portable; no-op on 1-TC chips

    return pl.pallas_call(
        simple_nn_kernel,
        out_shape=jax.ShapeDtypeStruct((B, A), jnp.float32),
        grid=grid,
        in_specs=in_specs,
        out_specs=out_specs,
        compiler_params=pltpu.CompilerParams(
            dimension_semantics=dim_sem,
            vmem_limit_bytes=32 * 1024 * 1024),  # safely under v7x's 64 MiB
        cost_estimate=pl.CostEstimate(
            flops=flops, transcendentals=0, bytes_accessed=io_bytes),
    )(*args)


def init_params(key, state_dim, action_dim, hidden_dim):
    """Deterministic init mirroring nn.Linear's uniform(-1/sqrt(in), 1/sqrt(in)).

    Weights are created directly in (in_features, out_features) layout, i.e.
    the transpose of PyTorch's Linear.weight.
    """
    dims = [(state_dim, hidden_dim),
            (hidden_dim, hidden_dim),
            (hidden_dim, hidden_dim),
            (hidden_dim, action_dim)]
    params = []
    for (fan_in, fan_out) in dims:
        key, kw, kb = jax.random.split(key, 3)
        bound = 1.0 / jnp.sqrt(fan_in)
        w = jax.random.uniform(kw, (fan_in, fan_out), jnp.float32, -bound, bound)
        b = jax.random.uniform(kb, (1, fan_out), jnp.float32, -bound, bound)
        params.append((w, b))
    return tuple(params)


def reference_forward(x, params):
    (w1, b1), (w2, b2), (w3, b3), (w4, b4) = params
    h = jax.nn.leaky_relu(x @ w1 + b1, 0.01)
    h = jax.nn.leaky_relu(h @ w2 + b2, 0.01)
    h = jax.nn.leaky_relu(h @ w3 + b3, 0.01)
    return h @ w4 + b4


if __name__ == "__main__":
    state_dim, hidden_dim, action_dim = 16, 32, 4

    key = jax.random.PRNGKey(0)
    key, kx_small, kx_big = jax.random.split(key, 3)
    params = init_params(key, state_dim, action_dim, hidden_dim)

    fwd = jax.jit(
        simple_nn_forward,
        static_argnames=("tile_batch", "small_batch_threshold", "core_parallel"))

    # --- f32 storage (exact module semantics) -------------------------------
    params_f32 = prepare_params(params, jnp.float32)

    # Small batch -> latency-bound no-grid fast path.
    x_small = jax.random.normal(kx_small, (2, state_dim), jnp.float32)
    out_small = jax.block_until_ready(fwd(x_small, params_f32))
    ref_small = reference_forward(x_small, params)
    assert out_small.shape == (2, action_dim)
    assert jnp.allclose(out_small, ref_small, atol=1e-5, rtol=1e-5), \
        "small-batch f32 mismatch vs reference"

    # Larger batch (not a multiple of the tile) -> batch-tiled grid path with
    # resident weights and a clipped edge block.
    x_big = jax.random.normal(kx_big, (1000, state_dim), jnp.float32)
    out_big = jax.block_until_ready(fwd(x_big, params_f32, tile_batch=512))
    ref_big = reference_forward(x_big, params)
    assert out_big.shape == (1000, action_dim)
    assert jnp.allclose(out_big, ref_big, atol=1e-4, rtol=1e-4), \
        "tiled-batch f32 mismatch vs reference"

    # --- bf16 matmul stream, f32 accumulate (mem-bound perf variant) --------
    params_bf16 = prepare_params(params, jnp.bfloat16)
    out_bf16 = jax.block_until_ready(fwd(x_big, params_bf16, tile_batch=512))
    assert out_bf16.shape == (1000, action_dim)
    assert jnp.allclose(out_bf16, ref_big, atol=5e-2, rtol=5e-2), \
        "tiled-batch bf16 mismatch vs reference"

    print("KERNEL_OK")
</pallas_src>

<mosaic_0001>
module attributes {stable_mosaic.version = 11 : i64} {
  func.func @simple_nn_kernel(%arg0: memref<2x16xf32, #tpu.memory_space<vmem>>, %arg1: memref<16x32xf32, #tpu.memory_space<vmem>>, %arg2: memref<1x32xf32, #tpu.memory_space<vmem>>, %arg3: memref<32x32xf32, #tpu.memory_space<vmem>>, %arg4: memref<1x32xf32, #tpu.memory_space<vmem>>, %arg5: memref<32x32xf32, #tpu.memory_space<vmem>>, %arg6: memref<1x32xf32, #tpu.memory_space<vmem>>, %arg7: memref<32x4xf32, #tpu.memory_space<vmem>>, %arg8: memref<1x4xf32, #tpu.memory_space<vmem>>, %arg9: memref<2x4xf32, #tpu.memory_space<vmem>>) attributes {dimension_semantics = [], scalar_prefetch = 0 : i64, scratch_operands = 0 : i64, tpu.core_type = #tpu.core_type<tc>} {
    %c0 = arith.constant 0 : index
    %c0_0 = arith.constant 0 : index
    %0 = vector.load %arg0[%c0, %c0_0] : memref<2x16xf32, #tpu.memory_space<vmem>>, vector<2x16xf32>
    %c0_1 = arith.constant 0 : index
    %c0_2 = arith.constant 0 : index
    %1 = vector.load %arg1[%c0_1, %c0_2] : memref<16x32xf32, #tpu.memory_space<vmem>>, vector<16x32xf32>
    %cst = arith.constant dense<0.000000e+00> : vector<2x32xf32>
    %2 = tpu.matmul %0, %1, %cst {dimension_numbers = #tpu.dot_dimension_numbers<[1], [0], [0], [1], [0, 0, 1, 1], [], []>} : vector<2x16xf32>, vector<16x32xf32>, vector<2x32xf32> -> vector<2x32xf32>
    %c0_3 = arith.constant 0 : index
    %c0_4 = arith.constant 0 : index
    %3 = vector.load %arg2[%c0_3, %c0_4] : memref<1x32xf32, #tpu.memory_space<vmem>>, vector<1x32xf32>
    %4 = vector.broadcast %3 : vector<1x32xf32> to vector<2x32xf32>
    %5 = arith.addf %2, %4 : vector<2x32xf32>
    %cst_5 = arith.constant 0.000000e+00 : f32
    %6 = vector.broadcast %cst_5 : f32 to vector<2x32xf32>
    %7 = arith.cmpf ogt, %5, %6 : vector<2x32xf32>
    %cst_6 = arith.constant 0.00999999977 : f32
    %8 = vector.broadcast %cst_6 : f32 to vector<2x32xf32>
    %9 = arith.mulf %8, %5 : vector<2x32xf32>
    %10 = arith.select %7, %5, %9 : vector<2x32xi1>, vector<2x32xf32>
    %c0_7 = arith.constant 0 : index
    %c0_8 = arith.constant 0 : index
    %11 = vector.load %arg3[%c0_7, %c0_8] : memref<32x32xf32, #tpu.memory_space<vmem>>, vector<32x32xf32>
    %cst_9 = arith.constant dense<0.000000e+00> : vector<2x32xf32>
    %12 = tpu.matmul %10, %11, %cst_9 {dimension_numbers = #tpu.dot_dimension_numbers<[1], [0], [0], [1], [0, 0, 1, 1], [], []>} : vector<2x32xf32>, vector<32x32xf32>, vector<2x32xf32> -> vector<2x32xf32>
    %c0_10 = arith.constant 0 : index
    %c0_11 = arith.constant 0 : index
    %13 = vector.load %arg4[%c0_10, %c0_11] : memref<1x32xf32, #tpu.memory_space<vmem>>, vector<1x32xf32>
    %14 = vector.broadcast %13 : vector<1x32xf32> to vector<2x32xf32>
    %15 = arith.addf %12, %14 : vector<2x32xf32>
    %cst_12 = arith.constant 0.000000e+00 : f32
    %16 = vector.broadcast %cst_12 : f32 to vector<2x32xf32>
    %17 = arith.cmpf ogt, %15, %16 : vector<2x32xf32>
    %cst_13 = arith.constant 0.00999999977 : f32
    %18 = vector.broadcast %cst_13 : f32 to vector<2x32xf32>
    %19 = arith.mulf %18, %15 : vector<2x32xf32>
    %20 = arith.select %17, %15, %19 : vector<2x32xi1>, vector<2x32xf32>
    %c0_14 = arith.constant 0 : index
    %c0_15 = arith.constant 0 : index
    %21 = vector.load %arg5[%c0_14, %c0_15] : memref<32x32xf32, #tpu.memory_space<vmem>>, vector<32x32xf32>
    %cst_16 = arith.constant dense<0.000000e+00> : vector<2x32xf32>
    %22 = tpu.matmul %20, %21, %cst_16 {dimension_numbers = #tpu.dot_dimension_numbers<[1], [0], [0], [1], [0, 0, 1, 1], [], []>} : vector<2x32xf32>, vector<32x32xf32>, vector<2x32xf32> -> vector<2x32xf32>
    %c0_17 = arith.constant 0 : index
    %c0_18 = arith.constant 0 : index
    %23 = vector.load %arg6[%c0_17, %c0_18] : memref<1x32xf32, #tpu.memory_space<vmem>>, vector<1x32xf32>
    %24 = vector.broadcast %23 : vector<1x32xf32> to vector<2x32xf32>
    %25 = arith.addf %22, %24 : vector<2x32xf32>
    %cst_19 = arith.constant 0.000000e+00 : f32
    %26 = vector.broadcast %cst_19 : f32 to vector<2x32xf32>
    %27 = arith.cmpf ogt, %25, %26 : vector<2x32xf32>
    %cst_20 = arith.constant 0.00999999977 : f32
    %28 = vector.broadcast %cst_20 : f32 to vector<2x32xf32>
    %29 = arith.mulf %28, %25 : vector<2x32xf32>
    %30 = arith.select %27, %25, %29 : vector<2x32xi1>, vector<2x32xf32>
    %c0_21 = arith.constant 0 : index
    %c0_22 = arith.constant 0 : index
    %31 = vector.load %arg7[%c0_21, %c0_22] : memref<32x4xf32, #tpu.memory_space<vmem>>, vector<32x4xf32>
    %cst_23 = arith.constant dense<0.000000e+00> : vector<2x4xf32>
    %32 = tpu.matmul %30, %31, %cst_23 {dimension_numbers = #tpu.dot_dimension_numbers<[1], [0], [0], [1], [0, 0, 1, 1], [], []>} : vector<2x32xf32>, vector<32x4xf32>, vector<2x4xf32> -> vector<2x4xf32>
    %c0_24 = arith.constant 0 : index
    %c0_25 = arith.constant 0 : index
    %33 = vector.load %arg8[%c0_24, %c0_25] : memref<1x4xf32, #tpu.memory_space<vmem>>, vector<1x4xf32>
    %34 = vector.broadcast %33 : vector<1x4xf32> to vector<2x4xf32>
    %35 = arith.addf %32, %34 : vector<2x4xf32>
    %c0_26 = arith.constant 0 : index
    %c0_27 = arith.constant 0 : index
    %36 = vector.load %arg9[%c0_26, %c0_27] : memref<2x4xf32, #tpu.memory_space<vmem>>, vector<2x4xf32>
    tpu.vector_store %arg9[%c0_26, %c0_27], %35 {strides = array<i32>} : memref<2x4xf32, #tpu.memory_space<vmem>>, vector<2x4xf32>,
    return
  }
}

</mosaic_0001>

<llo_original>
// kernel: simple_nn_forward.1
$region0: #{simple_nn_forward.1}
  #allocation0 [shape = 'u32[]', space=smem, size = 0x4, offset = 0x4, fixed_abs, tag = 'smem constant byte address 0x4 - core index']
  #allocation1 [shape = 'u32[144,128]{1,0:T(1,128)}', space=vmem, size = 0x12000, scoped, tag = 'internal scratch']
  %s0 = inlined_call_operand.vmem [shape: f32[2,16], index: 0, kind: input, shape index: {}]
  %s1 = inlined_call_operand.hbm [shape: f32[16,32], index: 1, kind: input, shape index: {}]
  %s2 = inlined_call_operand.vmem [shape: f32[1,32], index: 2, kind: input, shape index: {}]
  %s3 = inlined_call_operand.vmem [shape: f32[32,32], index: 3, kind: input, shape index: {}]
  %s4 = inlined_call_operand.vmem [shape: f32[1,32], index: 4, kind: input, shape index: {}]
  %s5 = inlined_call_operand.hbm [shape: f32[32,32], index: 5, kind: input, shape index: {}]
  %s6 = inlined_call_operand.vmem [shape: f32[1,32], index: 6, kind: input, shape index: {}]
  %s7 = inlined_call_operand.vmem [shape: f32[32,4], index: 7, kind: input, shape index: {}]
  %s8 = inlined_call_operand.vmem [shape: f32[1,4], index: 8, kind: input, shape index: {}]
  %s9 = inlined_call_operand.hbm [shape: f32[2,4], index: 9, kind: output, shape index: {}]
  %s10 = sld [smem:[#allocation0]]
  $region54: #{simple_nn_forward.1} parent=0
    _
  %s12 = ssub.s32 1, %s10
  %s13 = scalar_select 0, %s12, %s10
  $region1: #{simple_nn_forward.1} parent=0
    #allocation2 [shape = 'u8[8192]{0}', space=vmem, size = 0x2000, scoped, tag = 'input window, operand 1, single buffered']
    #allocation3 [shape = 's32[1]{0}', space=sflag, size = 0x4, scoped, tag = 'scoped memory for simple_nn_forward.1']
    #allocation4 [shape = 's32[1]{0}', space=sflag, size = 0x4, scoped, tag = 'scoped memory for simple_nn_forward.1']
    #allocation5 [shape = 'u8[16384]{0}', space=vmem, size = 0x4000, scoped, tag = 'input window, operand 5, single buffered']
    #allocation6 [shape = 's32[1]{0}', space=sflag, size = 0x4, scoped, tag = 'scoped memory for simple_nn_forward.1']
    #allocation7 [shape = 'u8[1024]{0}', space=vmem, size = 0x400, scoped, tag = 'output window, operand 0, single buffered']
    %14 = vsyncpa [#allocation3], 0
    %15 = vsyncpa [#allocation6], 0
    %16 = vsyncpa [#allocation4], 0
    // Predicated region
    $region2: #{simple_nn_forward.1} parent=1 // pred_check
      _
    $region3: #{simple_nn_forward.1} parent=1 // pred_check_branch
      %18 = sbr.rel (0) target = $region5
    $region4: #{simple_nn_forward.1} parent=1 // pred_region
      _
    $region5: #{simple_nn_forward.1} parent=1 // pred_fallthru
      _
    // Predicated region
    $region6: #{simple_nn_forward.1} parent=1 // pred_check
      _
    $region7: #{simple_nn_forward.1} parent=1 // pred_check_branch
      %20 = sbr.rel (0) target = $region9
    $region8: #{simple_nn_forward.1} parent=1 // pred_region
      %s22 = ssub.s32 256, 256
      %23 = vsyncadd [#allocation3], %s22
      %s24 = sshll.u32 [#allocation2], 4
      %s25 = int_to_ptr.vmem [resolvable:$true] %s24
      %30 = dma.hbm_to_vmem [thread:$0]  %s1, 256, %s25, [#allocation3], 128, 128, 8
    $region9: #{simple_nn_forward.1} parent=1 // pred_fallthru
      _
    // Predicated region
    $region10: #{simple_nn_forward.1} parent=1 // pred_check
      _
    $region11: #{simple_nn_forward.1} parent=1 // pred_check_branch
      %32 = sbr.rel (0) target = $region13
    $region12: #{simple_nn_forward.1} parent=1 // pred_region
      _
    $region13: #{simple_nn_forward.1} parent=1 // pred_fallthru
      _
    // Predicated region
    $region14: #{simple_nn_forward.1} parent=1 // pred_check
      _
    $region15: #{simple_nn_forward.1} parent=1 // pred_check_branch
      %34 = sbr.rel (0) target = $region17
    $region16: #{simple_nn_forward.1} parent=1 // pred_region
      _
    $region17: #{simple_nn_forward.1} parent=1 // pred_fallthru
      _
    // Predicated region
    $region18: #{simple_nn_forward.1} parent=1 // pred_check
      _
    $region19: #{simple_nn_forward.1} parent=1 // pred_check_branch
      %36 = sbr.rel (0) target = $region21
    $region20: #{simple_nn_forward.1} parent=1 // pred_region
      _
    $region21: #{simple_nn_forward.1} parent=1 // pred_fallthru
      _
    // Predicated region
    $region22: #{simple_nn_forward.1} parent=1 // pred_check
      _
    $region23: #{simple_nn_forward.1} parent=1 // pred_check_branch
      %38 = sbr.rel (0) target = $region25
    $region24: #{simple_nn_forward.1} parent=1 // pred_region
      %s40 = ssub.s32 512, 512
      %41 = vsyncadd [#allocation6], %s40
      %s42 = sshll.u32 [#allocation5], 4
      %s43 = int_to_ptr.vmem [resolvable:$true] %s42
      %48 = dma.hbm_to_vmem [thread:$0]  %s5, 512, %s43, [#allocation6], 128, 128, 8
    $region25: #{simple_nn_forward.1} parent=1 // pred_fallthru
      _
    // Predicated region
    $region26: #{simple_nn_forward.1} parent=1 // pred_check
      _
    $region27: #{simple_nn_forward.1} parent=1 // pred_check_branch
      %50 = sbr.rel (0) target = $region29
    $region28: #{simple_nn_forward.1} parent=1 // pred_region
      _
    $region29: #{simple_nn_forward.1} parent=1 // pred_fallthru
      _
    // Predicated region
    $region30: #{simple_nn_forward.1} parent=1 // pred_check
      _
    $region31: #{simple_nn_forward.1} parent=1 // pred_check_branch
      %52 = sbr.rel (0) target = $region33
    $region32: #{simple_nn_forward.1} parent=1 // pred_region
      _
    $region33: #{simple_nn_forward.1} parent=1 // pred_fallthru
      _
    // Predicated region
    $region34: #{simple_nn_forward.1} parent=1 // pred_check
      _
    $region35: #{simple_nn_forward.1} parent=1 // pred_check_branch
      %54 = sbr.rel (0) target = $region37
    $region36: #{simple_nn_forward.1} parent=1 // pred_region
      _
    $region37: #{simple_nn_forward.1} parent=1 // pred_fallthru
      _
    // Predicated region
    $region38: #{simple_nn_forward.1} parent=1 // pred_check
      _
    $region39: #{simple_nn_forward.1} parent=1 // pred_check_branch
      %56 = sbr.rel (0) target = $region41
    $region40: #{simple_nn_forward.1} parent=1 // pred_region
      %57 = dma.done [#allocation3], 256
    $region41: #{simple_nn_forward.1} parent=1 // pred_fallthru
      _
    // Predicated region
    $region42: #{simple_nn_forward.1} parent=1 // pred_check
      _
    $region43: #{simple_nn_forward.1} parent=1 // pred_check_branch
      %59 = sbr.rel (0) target = $region45
    $region44: #{simple_nn_forward.1} parent=1 // pred_region
      %60 = dma.done [#allocation6], 512
    $region45: #{simple_nn_forward.1} parent=1 // pred_fallthru
      _
    %v61 = vld [vmem:[%s0] sm:$0x3]
    %v62 = vld [vmem:[#allocation2] sm:$0xff]
    %v63 = vld [vmem:[#allocation2 + $0x8] sm:$0xff]
    %v64 = vld [vmem:[%s2] sm:$0x1]
    %v66 = vlaneseq
    %v67 = vshrl.u32 %v66, 7
    %v68 = vsub.s32 0, %v67
    %v69 = vrot.slane %v64, %v68
    %vm71 = vcmask 130048
    %v73 = vsel %vm71, %v61, 0
    %75 = vmatprep.subr.mxu0 0.0
    %76 = vmatpush1.msra.mxu0 %v62
    %77 = vmatprep.subr.mxu0 0.0
    %78 = vmatpush1.msra.mxu0 %v63
    %79 = vmatprep.subr.mxu0 0.0
    %80 = vmatpush1.msra.mxu0 0.0
    %81 = vmatprep.subr.mxu0 0.0
    %82 = vmatpush1.msra.mxu0 0.0
    %83 = vmatprep.subr.mxu0 0.0
    %84 = vmatpush1.msra.mxu0 0.0
    %85 = vmatprep.subr.mxu0 0.0
    %86 = vmatpush1.msra.mxu0 0.0
    %87 = vmatprep.subr.mxu0 0.0
    %88 = vmatpush1.msra.mxu0 0.0
    %89 = vmatprep.subr.mxu0 0.0
    %90 = vmatpush1.msra.mxu0 0.0
    %91 = vmatprep.subr.mxu0 0.0
    %92 = vmatpush1.msra.mxu0 0.0
    %93 = vmatprep.subr.mxu0 0.0
    %94 = vmatpush1.msra.mxu0 0.0
    %95 = vmatprep.subr.mxu0 0.0
    %96 = vmatpush1.msra.mxu0 0.0
    %97 = vmatprep.subr.mxu0 0.0
    %98 = vmatpush1.msra.mxu0 0.0
    %99 = vmatprep.subr.mxu0 0.0
    %100 = vmatpush1.msra.mxu0 0.0
    %101 = vmatprep.subr.mxu0 0.0
    %102 = vmatpush1.msra.mxu0 0.0
    %103 = vmatprep.subr.mxu0 0.0
    %104 = vmatpush1.msra.mxu0 0.0
    %105 = vmatprep.subr.mxu0 0.0
    %106 = vmatpush1.msra.mxu0 0.0
    %107 = vmatprep.subr.mxu0 0.0
    %108 = vmatpush1.msra.mxu0 0.0
    %109 = vmatprep.subr.mxu0 0.0
    %110 = vmatpush1.msra.mxu0 0.0
    %111 = vmatprep.subr.mxu0 0.0
    %112 = vmatpush1.msra.mxu0 0.0
    %113 = vmatprep.subr.mxu0 0.0
    %114 = vmatpush1.msra.mxu0 0.0
    %115 = vmatprep.subr.mxu0 0.0
    %116 = vmatpush1.msra.mxu0 0.0
    %117 = vmatprep.subr.mxu0 0.0
    %118 = vmatpush1.msra.mxu0 0.0
    %119 = vmatprep.subr.mxu0 0.0
    %120 = vmatpush1.msra.mxu0 0.0
    %121 = vmatprep.subr.mxu0 0.0
    %122 = vmatpush1.msra.mxu0 0.0
    %123 = vmatprep.subr.mxu0 0.0
    %124 = vmatpush1.msra.mxu0 0.0
    %125 = vmatprep.subr.mxu0 0.0
    %126 = vmatpush1.msra.mxu0 0.0
    %127 = vmatprep.subr.mxu0 0.0
    %128 = vmatpush1.msra.mxu0 0.0
    %129 = vmatprep.subr.mxu0 0.0
    %130 = vmatpush1.msra.mxu0 0.0
    %131 = vmatprep.subr.mxu0 0.0
    %132 = vmatpush1.msra.mxu0 0.0
    %133 = vmatprep.subr.mxu0 0.0
    %134 = vmatpush1.msra.mxu0 0.0
    %135 = vmatprep.subr.mxu0 0.0
    %136 = vmatpush1.msra.mxu0 0.0
    %137 = vmatprep.subr.mxu0 0.0
    %138 = vmatpush1.msra.mxu0 0.0
    %139 = vmatprep.mubr.f32.mxu0 0.0
    %140 = vmatmul.mubr.f32.gmra.mrb[0].mxu0 %v73
    %v141 = vpop.f32.mrb[0].mxu0
    %v142 = vadd.f32 %v69, %v141
    %v143 = vpop.f32.mrb[0].mxu0
    %144 = vdwg.mxu0
    %vm145 = vcmp.gt.f32.partialorder %v142, 0.0
    %v146 = vmul.f32 %v142, 0.01
    %v147 = vsel %vm145, %v142, %v146
    %v148 = vld [vmem:[%s3] sm:$0xff]
    %v149 = vld [vmem:[%s3 + $0x8] sm:$0xff]
    %v150 = vld [vmem:[%s3 + $0x10] sm:$0xff]
    %v151 = vld [vmem:[%s3 + $0x18] sm:$0xff]
    %v152 = vld [vmem:[%s4] sm:$0x1]
    %v154 = vlaneseq
    %v155 = vshrl.u32 %v154, 7
    %v156 = vsub.s32 0, %v155
    %v157 = vrot.slane %v152, %v156
    %vm159 = vcmask 261120
    %v161 = vsel %vm159, %v147, 0
    %163 = vmatprep.subr.mxu0 0.0
    %164 = vmatpush1.msra.mxu0 %v148
    %165 = vmatprep.subr.mxu0 0.0
    %166 = vmatpush1.msra.mxu0 %v149
    %167 = vmatprep.subr.mxu0 0.0
    %168 = vmatpush1.msra.mxu0 %v150
    %169 = vmatprep.subr.mxu0 0.0
    %170 = vmatpush1.msra.mxu0 %v151
    %171 = vmatprep.subr.mxu0 0.0
    %172 = vmatpush1.msra.mxu0 0.0
    %173 = vmatprep.subr.mxu0 0.0
    %174 = vmatpush1.msra.mxu0 0.0
    %175 = vmatprep.subr.mxu0 0.0
    %176 = vmatpush1.msra.mxu0 0.0
    %177 = vmatprep.subr.mxu0 0.0
    %178 = vmatpush1.msra.mxu0 0.0
    %179 = vmatprep.subr.mxu0 0.0
    %180 = vmatpush1.msra.mxu0 0.0
    %181 = vmatprep.subr.mxu0 0.0
    %182 = vmatpush1.msra.mxu0 0.0
    %183 = vmatprep.subr.mxu0 0.0
    %184 = vmatpush1.msra.mxu0 0.0
    %185 = vmatprep.subr.mxu0 0.0
    %186 = vmatpush1.msra.mxu0 0.0
    %187 = vmatprep.subr.mxu0 0.0
    %188 = vmatpush1.msra.mxu0 0.0
    %189 = vmatprep.subr.mxu0 0.0
    %190 = vmatpush1.msra.mxu0 0.0
    %191 = vmatprep.subr.mxu0 0.0
    %192 = vmatpush1.msra.mxu0 0.0
    %193 = vmatprep.subr.mxu0 0.0
    %194 = vmatpush1.msra.mxu0 0.0
    %195 = vmatprep.subr.mxu0 0.0
    %196 = vmatpush1.msra.mxu0 0.0
    %197 = vmatprep.subr.mxu0 0.0
    %198 = vmatpush1.msra.mxu0 0.0
    %199 = vmatprep.subr.mxu0 0.0
    %200 = vmatpush1.msra.mxu0 0.0
    %201 = vmatprep.subr.mxu0 0.0
    %202 = vmatpush1.msra.mxu0 0.0
    %203 = vmatprep.subr.mxu0 0.0
    %204 = vmatpush1.msra.mxu0 0.0
    %205 = vmatprep.subr.mxu0 0.0
    %206 = vmatpush1.msra.mxu0 0.0
    %207 = vmatprep.subr.mxu0 0.0
    %208 = vmatpush1.msra.mxu0 0.0
    %209 = vmatprep.subr.mxu0 0.0
    %210 = vmatpush1.msra.mxu0 0.0
    %211 = vmatprep.subr.mxu0 0.0
    %212 = vmatpush1.msra.mxu0 0.0
    %213 = vmatprep.subr.mxu0 0.0
    %214 = vmatpush1.msra.mxu0 0.0
    %215 = vmatprep.subr.mxu0 0.0
    %216 = vmatpush1.msra.mxu0 0.0
    %217 = vmatprep.subr.mxu0 0.0
    %218 = vmatpush1.msra.mxu0 0.0
    %219 = vmatprep.subr.mxu0 0.0
    %220 = vmatpush1.msra.mxu0 0.0
    %221 = vmatprep.subr.mxu0 0.0
    %222 = vmatpush1.msra.mxu0 0.0
    %223 = vmatprep.subr.mxu0 0.0
    %224 = vmatpush1.msra.mxu0 0.0
    %225 = vmatprep.subr.mxu0 0.0
    %226 = vmatpush1.msra.mxu0 0.0
    %227 = vmatprep.mubr.f32.mxu0 0.0
    %228 = vmatmul.mubr.f32.gmra.mrb[0].mxu0 %v161
    %v229 = vpop.f32.mrb[0].mxu0
    %v230 = vadd.f32 %v157, %v229
    %v231 = vpop.f32.mrb[0].mxu0
    %232 = vdwg.mxu0
    %vm233 = vcmp.gt.f32.partialorder %v230, 0.0
    %v234 = vmul.f32 %v230, 0.01
    %v235 = vsel %vm233, %v230, %v234
    %v236 = vld [vmem:[#allocation5] sm:$0xff]
    %v237 = vld [vmem:[#allocation5 + $0x8] sm:$0xff]
    %v238 = vld [vmem:[#allocation5 + $0x10] sm:$0xff]
    %v239 = vld [vmem:[#allocation5 + $0x18] sm:$0xff]
    %v240 = vld [vmem:[%s6] sm:$0x1]
    %v242 = vlaneseq
    %v243 = vshrl.u32 %v242, 7
    %v244 = vsub.s32 0, %v243
    %v245 = vrot.slane %v240, %v244
    %v248 = vsel %vm159, %v235, 0
    %250 = vmatprep.subr.mxu0 0.0
    %251 = vmatpush1.msra.mxu0 %v236
    %252 = vmatprep.subr.mxu0 0.0
    %253 = vmatpush1.msra.mxu0 %v237
    %254 = vmatprep.subr.mxu0 0.0
    %255 = vmatpush1.msra.mxu0 %v238
    %256 = vmatprep.subr.mxu0 0.0
    %257 = vmatpush1.msra.mxu0 %v239
    %258 = vmatprep.subr.mxu0 0.0
    %259 = vmatpush1.msra.mxu0 0.0
    %260 = vmatprep.subr.mxu0 0.0
    %261 = vmatpush1.msra.mxu0 0.0
    %262 = vmatprep.subr.mxu0 0.0
    %263 = vmatpush1.msra.mxu0 0.0
    %264 = vmatprep.subr.mxu0 0.0
    %265 = vmatpush1.msra.mxu0 0.0
    %266 = vmatprep.subr.mxu0 0.0
    %267 = vmatpush1.msra.mxu0 0.0
    %268 = vmatprep.subr.mxu0 0.0
    %269 = vmatpush1.msra.mxu0 0.0
    %270 = vmatprep.subr.mxu0 0.0
    %271 = vmatpush1.msra.mxu0 0.0
    %272 = vmatprep.subr.mxu0 0.0
    %273 = vmatpush1.msra.mxu0 0.0
    %274 = vmatprep.subr.mxu0 0.0
    %275 = vmatpush1.msra.mxu0 0.0
    %276 = vmatprep.subr.mxu0 0.0
    %277 = vmatpush1.msra.mxu0 0.0
    %278 = vmatprep.subr.mxu0 0.0
    %279 = vmatpush1.msra.mxu0 0.0
    %280 = vmatprep.subr.mxu0 0.0
    %281 = vmatpush1.msra.mxu0 0.0
    %282 = vmatprep.subr.mxu0 0.0
    %283 = vmatpush1.msra.mxu0 0.0
    %284 = vmatprep.subr.mxu0 0.0
    %285 = vmatpush1.msra.mxu0 0.0
    %286 = vmatprep.subr.mxu0 0.0
    %287 = vmatpush1.msra.mxu0 0.0
    %288 = vmatprep.subr.mxu0 0.0
    %289 = vmatpush1.msra.mxu0 0.0
    %290 = vmatprep.subr.mxu0 0.0
    %291 = vmatpush1.msra.mxu0 0.0
    %292 = vmatprep.subr.mxu0 0.0
    %293 = vmatpush1.msra.mxu0 0.0
    %294 = vmatprep.subr.mxu0 0.0
    %295 = vmatpush1.msra.mxu0 0.0
    %296 = vmatprep.subr.mxu0 0.0
    %297 = vmatpush1.msra.mxu0 0.0
    %298 = vmatprep.subr.mxu0 0.0
    %299 = vmatpush1.msra.mxu0 0.0
    %300 = vmatprep.subr.mxu0 0.0
    %301 = vmatpush1.msra.mxu0 0.0
    %302 = vmatprep.subr.mxu0 0.0
    %303 = vmatpush1.msra.mxu0 0.0
    %304 = vmatprep.subr.mxu0 0.0
    %305 = vmatpush1.msra.mxu0 0.0
    %306 = vmatprep.subr.mxu0 0.0
    %307 = vmatpush1.msra.mxu0 0.0
    %308 = vmatprep.subr.mxu0 0.0
    %309 = vmatpush1.msra.mxu0 0.0
    %310 = vmatprep.subr.mxu0 0.0
    %311 = vmatpush1.msra.mxu0 0.0
    %312 = vmatprep.subr.mxu0 0.0
    %313 = vmatpush1.msra.mxu0 0.0
    %314 = vmatprep.mubr.f32.mxu0 0.0
    %315 = vmatmul.mubr.f32.gmra.mrb[0].mxu0 %v248
    %v316 = vpop.f32.mrb[0].mxu0
    %v317 = vadd.f32 %v245, %v316
    %v318 = vpop.f32.mrb[0].mxu0
    %319 = vdwg.mxu0
    %vm320 = vcmp.gt.f32.partialorder %v317, 0.0
    %v321 = vmul.f32 %v317, 0.01
    %v322 = vsel %vm320, %v317, %v321
    %v323 = vld [vmem:[%s7] sm:$0xff]
    %v324 = vld [vmem:[%s7 + $0x8] sm:$0xff]
    %v325 = vld [vmem:[%s7 + $0x10] sm:$0xff]
    %v326 = vld [vmem:[%s7 + $0x18] sm:$0xff]
    %v327 = vld [vmem:[%s8] sm:$0x1]
    %v329 = vlaneseq
    %v330 = vshrl.u32 %v329, 7
    %v331 = vsub.s32 0, %v330
    %v332 = vrot.slane %v327, %v331
    %v335 = vsel %vm159, %v322, 0
    %337 = vmatprep.subr.mxu0 0.0
    %338 = vmatpush1.msra.mxu0 %v323
    %339 = vmatprep.subr.mxu0 0.0
    %340 = vmatpush1.msra.mxu0 %v324
    %341 = vmatprep.subr.mxu0 0.0
    %342 = vmatpush1.msra.mxu0 %v325
    %343 = vmatprep.subr.mxu0 0.0
    %344 = vmatpush1.msra.mxu0 %v326
    %345 = vmatprep.subr.mxu0 0.0
    %346 = vmatpush1.msra.mxu0 0.0
    %347 = vmatprep.subr.mxu0 0.0
    %348 = vmatpush1.msra.mxu0 0.0
    %349 = vmatprep.subr.mxu0 0.0
    %350 = vmatpush1.msra.mxu0 0.0
    %351 = vmatprep.subr.mxu0 0.0
    %352 = vmatpush1.msra.mxu0 0.0
    %353 = vmatprep.subr.mxu0 0.0
    %354 = vmatpush1.msra.mxu0 0.0
    %355 = vmatprep.subr.mxu0 0.0
    %356 = vmatpush1.msra.mxu0 0.0
    %357 = vmatprep.subr.mxu0 0.0
    %358 = vmatpush1.msra.mxu0 0.0
    %359 = vmatprep.subr.mxu0 0.0
    %360 = vmatpush1.msra.mxu0 0.0
    %361 = vmatprep.subr.mxu0 0.0
    %362 = vmatpush1.msra.mxu0 0.0
    %363 = vmatprep.subr.mxu0 0.0
    %364 = vmatpush1.msra.mxu0 0.0
    %365 = vmatprep.subr.mxu0 0.0
    %366 = vmatpush1.msra.mxu0 0.0
    %367 = vmatprep.subr.mxu0 0.0
    %368 = vmatpush1.msra.mxu0 0.0
    %369 = vmatprep.subr.mxu0 0.0
    %370 = vmatpush1.msra.mxu0 0.0
    %371 = vmatprep.subr.mxu0 0.0
    %372 = vmatpush1.msra.mxu0 0.0
    %373 = vmatprep.subr.mxu0 0.0
    %374 = vmatpush1.msra.mxu0 0.0
    %375 = vmatprep.subr.mxu0 0.0
    %376 = vmatpush1.msra.mxu0 0.0
    %377 = vmatprep.subr.mxu0 0.0
    %378 = vmatpush1.msra.mxu0 0.0
    %379 = vmatprep.subr.mxu0 0.0
    %380 = vmatpush1.msra.mxu0 0.0
    %381 = vmatprep.subr.mxu0 0.0
    %382 = vmatpush1.msra.mxu0 0.0
    %383 = vmatprep.subr.mxu0 0.0
    %384 = vmatpush1.msra.mxu0 0.0
    %385 = vmatprep.subr.mxu0 0.0
    %386 = vmatpush1.msra.mxu0 0.0
    %387 = vmatprep.subr.mxu0 0.0
    %388 = vmatpush1.msra.mxu0 0.0
    %389 = vmatprep.subr.mxu0 0.0
    %390 = vmatpush1.msra.mxu0 0.0
    %391 = vmatprep.subr.mxu0 0.0
    %392 = vmatpush1.msra.mxu0 0.0
    %393 = vmatprep.subr.mxu0 0.0
    %394 = vmatpush1.msra.mxu0 0.0
    %395 = vmatprep.subr.mxu0 0.0
    %396 = vmatpush1.msra.mxu0 0.0
    %397 = vmatprep.subr.mxu0 0.0
    %398 = vmatpush1.msra.mxu0 0.0
    %399 = vmatprep.subr.mxu0 0.0
    %400 = vmatpush1.msra.mxu0 0.0
    %401 = vmatprep.mubr.f32.mxu0 0.0
    %402 = vmatmul.mubr.f32.gmra.mrb[0].mxu0 %v335
    %v403 = vpop.f32.mrb[0].mxu0
    %v404 = vadd.f32 %v332, %v403
    %v405 = vpop.f32.mrb[0].mxu0
    %406 = vdwg.mxu0
    %vm407 = vcmask 25600
    %408 = vst.msk [vmem:[#allocation7] sm:$0x3] %vm407, %v404
    // Predicated region
    $region46: #{simple_nn_forward.1} parent=1 // pred_check
      _
    $region47: #{simple_nn_forward.1} parent=1 // pred_check_branch
      %410 = sbr.rel (0) target = $region49
    $region48: #{simple_nn_forward.1} parent=1 // pred_region
      %s412 = ssub.s32 32, 32
      %413 = vsyncadd [#allocation4], %s412
      %s415 = sshll.u32 [#allocation7], 4
      %s416 = int_to_ptr.vmem [resolvable:$true] %s415
      %418 = dma.vmem_to_hbm [thread:$0]  %s416, 32, %s9, [#allocation4]
    $region49: #{simple_nn_forward.1} parent=1 // pred_fallthru
      _
    // Predicated region
    $region50: #{simple_nn_forward.1} parent=1 // pred_check
      _
    $region51: #{simple_nn_forward.1} parent=1 // pred_check_branch
      %420 = sbr.rel (0) target = $region53
    $region52: #{simple_nn_forward.1} parent=1 // pred_region
      %421 = dma.done [#allocation4], 32
    $region53: #{simple_nn_forward.1} parent=1 // pred_fallthru
      _
    %422 = vsyncpa [#allocation3], 1
    %423 = vsyncpa [#allocation6], 1
    %424 = vsyncpa [#allocation4], 1

</llo_original>
